<compile_context>
chip_gen: v6e
topology: v6e:2x2x1
jax: 0.10.0
libtpu: 0.0.40
codegen_flags: <defaults>
</compile_context>

<pallas_src>
import math
import functools

import jax
import jax.numpy as jnp
from jax.experimental import pallas as pl
from jax.experimental.pallas import tpu as pltpu

_SAFE_LOG_EPS = 1e-22
_LOG_EPS = math.log(_SAFE_LOG_EPS)
_LANE = 128
_TARGET_BLOCK_ROWS = 4096        # 4096 x 128 f32 = 2 MiB per array per block


def _safe_log(x):
    return jnp.log(jnp.maximum(x, _SAFE_LOG_EPS))


def _round_up(a, b):
    return (a + b - 1) // b * b


def _cdiv(a, b):
    return -(-a // b)


def _sublane_align(dtype):
    # min sublane tile: f32 -> 8, bf16 -> 16, (u)int8 -> 32
    return max(8, 32 // max(jnp.dtype(dtype).itemsize, 1))


# ---------------------------------------------------------------------------
# Kernels
# ---------------------------------------------------------------------------
def _forward_body(x, noise, y_ref, ldj_ref, max_val, alpha):
    scale = 1.0 - 2.0 * alpha
    log_const = math.log(scale / max_val)
    x = x + noise                                   # dequantization noise
    x = scale * (x * (1.0 / max_val)) + alpha
    log_x = _safe_log(x)
    log_1_x = _safe_log(1.0 - x)
    y_ref[...] = (log_x - log_1_x).astype(y_ref.dtype)
    ldj_ref[...] = (log_const - log_x - log_1_x).astype(ldj_ref.dtype)


def _forward_noise_kernel(x_ref, noise_ref, y_ref, ldj_ref, *, max_val, alpha):
    _forward_body(x_ref[...].astype(jnp.float32),
                  noise_ref[...].astype(jnp.float32),
                  y_ref, ldj_ref, max_val, alpha)


def _uniform_from_bits(shape):
    """U[0,1) from the on-chip PRNG (mantissa trick); call prng_seed first."""
    bits = pltpu.prng_random_bits(shape)
    if bits.dtype != jnp.uint32:
        bits = pltpu.bitcast(bits, jnp.uint32)
    fbits = (bits >> 9) | jnp.uint32(0x3F800000)    # float in [1, 2)
    return pltpu.bitcast(fbits, jnp.float32) - 1.0


def _forward_prng_kernel(seed_ref, x_ref, y_ref, ldj_ref, *, max_val, alpha):
    # Real-TPU-only path (no interpret-mode lowering for prng_seed).
    pltpu.prng_seed(seed_ref[0], pl.program_id(0))  # independent noise per block
    noise = _uniform_from_bits(y_ref.shape)
    _forward_body(x_ref[...].astype(jnp.float32), noise, y_ref, ldj_ref,
                  max_val, alpha)


def _invert_kernel(x_ref, y_ref, ldj_ref, *, max_val, alpha):
    scale = 1.0 - 2.0 * alpha
    log_const = math.log(max_val) - math.log(scale)
    x = x_ref[...].astype(jnp.float32)
    s = jax.nn.sigmoid(x)
    # softplus(x) via the numerically stable max form (single exp).
    sp_pos = jnp.maximum(x, 0.0) + jnp.log(1.0 + jnp.exp(-jnp.abs(x)))
    sp_neg = sp_pos - x                              # softplus(-x)
    log_s = jnp.maximum(-sp_neg, _LOG_EPS)           # safe_log(sigmoid(x))
    log_1_s = jnp.maximum(-sp_pos, _LOG_EPS)         # safe_log(1 - sigmoid(x))
    y_ref[...] = (max_val * (s - alpha) * (1.0 / scale)).astype(y_ref.dtype)
    ldj_ref[...] = (log_s + log_1_s + log_const).astype(ldj_ref.dtype)


# ---------------------------------------------------------------------------
# Wrapper
# ---------------------------------------------------------------------------
def _plan(n, dtypes):
    """Pick (block_rows, rows, grid_len) for a flat element count n."""
    align = max(_sublane_align(d) for d in dtypes)
    rows = _round_up(_cdiv(n, _LANE), align)         # pad only to sublane x lane
    block_rows = min(_TARGET_BLOCK_ROWS, rows)       # biggest block that fits plan
    grid_len = _cdiv(rows, block_rows)               # partial last block allowed
    return block_rows, rows, grid_len


def _to_slab(arr, rows):
    flat = arr.reshape(-1)
    total = rows * _LANE
    if total != flat.shape[0]:                       # pad only when ragged (<=4 KiB)
        flat = jnp.pad(flat, (0, total - flat.shape[0]))
    return flat.reshape(rows, _LANE)


def _from_slab(slab, n, shape):
    flat = slab.reshape(-1)
    if flat.shape[0] != n:                           # slice only when padded
        flat = flat[:n]
    return flat.reshape(shape)


def _vmem_limit(block_rows, in_itemsizes, out_itemsize):
    per_step = sum(block_rows * _LANE * s for s in in_itemsizes)
    per_step += 2 * block_rows * _LANE * out_itemsize
    return int(min(max(2 * per_step + (2 << 20), 8 << 20), 100 << 20))


def preprocessor_forward(x, noise=None, *, invert=False, seed=0,
                         max_val=1, alpha=0.05, out_dtype=jnp.float32,
                         use_device_prng=False):
    """Pallas equivalent of Preprocessor(max_val, alpha).forward(x, invert).

    Returns (new_x, log_det_jac), both with x's shape and dtype `out_dtype`
    (use bf16 to halve output HBM traffic).  x may be a narrow quantized dtype
    (uint8/int8/bf16); it is cast to f32 inside the kernel.  For the forward
    pass the U(0,1) dequantization noise is either supplied explicitly, drawn
    host-side from `seed`, or (use_device_prng=True, TPU hardware only) drawn
    on-chip, which removes one whole HBM input stream.
    """
    mv = float(max_val + 1)                          # module does max_val + 1
    alpha = float(alpha)

    orig_shape = x.shape
    n = x.size

    prng_path = (not invert) and (noise is None) and use_device_prng
    if (not invert) and (noise is None) and (not use_device_prng):
        # Host/XLA-side noise (portable default).
        noise = jax.random.uniform(jax.random.PRNGKey(seed), orig_shape,
                                   dtype=jnp.float32)

    dtypes = [x.dtype, jnp.dtype(out_dtype)]
    in_itemsizes = [jnp.dtype(x.dtype).itemsize]
    if (not invert) and (not prng_path):
        dtypes.append(noise.dtype)
        in_itemsizes.append(jnp.dtype(noise.dtype).itemsize)

    block_rows, rows, grid_len = _plan(n, dtypes)
    x_slab = _to_slab(x, rows)
    out_slab = jax.ShapeDtypeStruct((rows, _LANE), out_dtype)
    out_shape = (out_slab, out_slab)

    cparams = pltpu.CompilerParams(
        dimension_semantics=("parallel",),
        vmem_limit_bytes=_vmem_limit(block_rows, in_itemsizes,
                                     jnp.dtype(out_dtype).itemsize))

    spec = pl.BlockSpec((block_rows, _LANE), lambda i: (i, 0))

    if invert:
        kernel = functools.partial(_invert_kernel, max_val=mv, alpha=alpha)
        y, ldj = pl.pallas_call(
            kernel, grid=(grid_len,),
            in_specs=[spec], out_specs=[spec, spec],
            out_shape=out_shape, compiler_params=cparams,
        )(x_slab)
    elif prng_path:
        # TPU-hardware-only: noise generated on-chip, seed via scalar prefetch.
        pspec = pl.BlockSpec((block_rows, _LANE), lambda i, seed_ref: (i, 0))
        kernel = functools.partial(_forward_prng_kernel, max_val=mv, alpha=alpha)
        seed_arr = jnp.asarray([seed], dtype=jnp.int32)
        grid_spec = pltpu.PrefetchScalarGridSpec(
            num_scalar_prefetch=1, grid=(grid_len,),
            in_specs=[pspec], out_specs=[pspec, pspec])
        y, ldj = pl.pallas_call(
            kernel, grid_spec=grid_spec,
            out_shape=out_shape, compiler_params=cparams,
        )(seed_arr, x_slab)
    else:
        noise_slab = _to_slab(noise, rows)
        kernel = functools.partial(_forward_noise_kernel, max_val=mv, alpha=alpha)
        y, ldj = pl.pallas_call(
            kernel, grid=(grid_len,),
            in_specs=[spec, spec], out_specs=[spec, spec],
            out_shape=out_shape, compiler_params=cparams,
        )(x_slab, noise_slab)

    return _from_slab(y, n, orig_shape), _from_slab(ldj, n, orig_shape)


# ---------------------------------------------------------------------------
# Pure-JAX reference (mirrors the PyTorch module)
# ---------------------------------------------------------------------------
def _reference(x, noise, invert, max_val=1, alpha=0.05):
    mv = float(max_val + 1)
    if invert:
        s = jax.nn.sigmoid(x)
        new_x = mv * (s - alpha) / (1.0 - 2.0 * alpha)
        ldj = (_safe_log(s) + _safe_log(1.0 - s)
               - math.log(1.0 - 2.0 * alpha) + math.log(mv))
        return new_x, ldj
    xx = (x + noise) / mv
    xx = (1.0 - 2.0 * alpha) * xx + alpha
    log_x = _safe_log(xx)
    log_1_x = _safe_log(1.0 - xx)
    return log_x - log_1_x, math.log((1.0 - 2.0 * alpha) / mv) - log_x - log_1_x


if __name__ == "__main__":
    key = jax.random.PRNGKey(0)
    k_data, k_noise, k_inv = jax.random.split(key, 3)

    # small image-like input: quantized pixels in [0, max_val]
    x = jax.random.randint(k_data, (2, 4, 16, 16), 0, 2).astype(jnp.float32)
    noise = jax.random.uniform(k_noise, x.shape, dtype=jnp.float32)

    # 1) forward with explicit noise: exact match vs reference
    y, ldj = jax.block_until_ready(preprocessor_forward(x, noise=noise, invert=False))
    y_ref, ldj_ref = _reference(x, noise, invert=False)
    assert y.shape == x.shape and ldj.shape == x.shape
    assert jnp.allclose(y, y_ref, atol=1e-5, rtol=1e-5)
    assert jnp.allclose(ldj, ldj_ref, atol=1e-5, rtol=1e-5)

    # 2) narrow (uint8) input, same noise: in-kernel cast, same results
    yq, ldjq = jax.block_until_ready(
        preprocessor_forward(x.astype(jnp.uint8), noise=noise, invert=False))
    assert jnp.allclose(yq, y_ref, atol=1e-5, rtol=1e-5)
    assert jnp.allclose(ldjq, ldj_ref, atol=1e-5, rtol=1e-5)

    # 3) default forward (noise drawn from seed): consistency checks
    y2, ldj2 = jax.block_until_ready(preprocessor_forward(x, invert=False, seed=1234))
    mv_c, a_c, scale_c = 2.0, 0.05, 0.9
    s2 = jax.nn.sigmoid(y2)                      # recovers transformed x
    u2 = mv_c * (s2 - a_c) / scale_c - x         # implied dequantization noise
    assert bool(jnp.all(u2 > -1e-3)) and bool(jnp.all(u2 < 1.0 + 1e-3))
    ldj_exp = math.log(scale_c / mv_c) - _safe_log(s2) - _safe_log(1.0 - s2)
    assert jnp.allclose(ldj2, ldj_exp, atol=1e-4, rtol=1e-4)

    # 4) inverse pass: exact match vs reference
    z = jax.random.normal(k_inv, x.shape, dtype=jnp.float32)
    yi, ldji = jax.block_until_ready(preprocessor_forward(z, invert=True))
    yi_ref, ldji_ref = _reference(z, None, invert=True)
    assert jnp.allclose(yi, yi_ref, atol=1e-5, rtol=1e-5)
    assert jnp.allclose(ldji, ldji_ref, atol=1e-5, rtol=1e-5)

    # 5) inverse pass with bf16 outputs (halved output HBM traffic), loose check
    yib, ldjib = jax.block_until_ready(
        preprocessor_forward(z, invert=True, out_dtype=jnp.bfloat16))
    assert yib.dtype == jnp.bfloat16 and ldjib.dtype == jnp.bfloat16
    assert jnp.allclose(yib.astype(jnp.float32), yi_ref, atol=0.05, rtol=0.05)
    assert jnp.allclose(ldjib.astype(jnp.float32), ldji_ref, atol=0.05, rtol=0.05)

    print("KERNEL_OK")
</pallas_src>

<mosaic_0001>
module attributes {stable_mosaic.version = 11 : i64} {
  func.func @_forward_noise_kernel(%arg0: i32, %arg1: memref<16x128xf32, #tpu.memory_space<vmem>>, %arg2: memref<16x128xf32, #tpu.memory_space<vmem>>, %arg3: memref<16x128xf32, #tpu.memory_space<vmem>>, %arg4: memref<16x128xf32, #tpu.memory_space<vmem>>) attributes {dimension_semantics = [#tpu.dimension_semantics<parallel>], iteration_bounds = array<i64: 1>, scalar_prefetch = 0 : i64, scratch_operands = 0 : i64, tpu.core_type = #tpu.core_type<tc>, window_params = [{transform_indices = @transform_0, window_bounds = array<i64: 16, 128>}, {transform_indices = @transform_1, window_bounds = array<i64: 16, 128>}, {transform_indices = @transform_2, window_bounds = array<i64: 16, 128>}, {transform_indices = @transform_3, window_bounds = array<i64: 16, 128>}]} {
    %c0 = arith.constant 0 : index
    %c0_0 = arith.constant 0 : index
    %0 = vector.load %arg1[%c0, %c0_0] : memref<16x128xf32, #tpu.memory_space<vmem>>, vector<16x128xf32>
    %c0_1 = arith.constant 0 : index
    %c0_2 = arith.constant 0 : index
    %1 = vector.load %arg2[%c0_1, %c0_2] : memref<16x128xf32, #tpu.memory_space<vmem>>, vector<16x128xf32>
    %2 = arith.addf %0, %1 : vector<16x128xf32>
    %cst = arith.constant 5.000000e-01 : f32
    %3 = vector.broadcast %cst : f32 to vector<16x128xf32>
    %4 = arith.mulf %2, %3 : vector<16x128xf32>
    %cst_3 = arith.constant 0.899999976 : f32
    %5 = vector.broadcast %cst_3 : f32 to vector<16x128xf32>
    %6 = arith.mulf %5, %4 : vector<16x128xf32>
    %cst_4 = arith.constant 5.000000e-02 : f32
    %7 = vector.broadcast %cst_4 : f32 to vector<16x128xf32>
    %8 = arith.addf %6, %7 : vector<16x128xf32>
    %cst_5 = arith.constant 1.000000e-22 : f32
    %9 = vector.broadcast %cst_5 : f32 to vector<16x128xf32>
    %10 = arith.maximumf %8, %9 : vector<16x128xf32>
    %11 = math.log %10 : vector<16x128xf32>
    %cst_6 = arith.constant 1.000000e+00 : f32
    %12 = vector.broadcast %cst_6 : f32 to vector<16x128xf32>
    %13 = arith.subf %12, %8 : vector<16x128xf32>
    %cst_7 = arith.constant 1.000000e-22 : f32
    %14 = vector.broadcast %cst_7 : f32 to vector<16x128xf32>
    %15 = arith.maximumf %13, %14 : vector<16x128xf32>
    %16 = math.log %15 : vector<16x128xf32>
    %17 = arith.subf %11, %16 : vector<16x128xf32>
    %c0_8 = arith.constant 0 : index
    %c0_9 = arith.constant 0 : index
    %18 = vector.load %arg3[%c0_8, %c0_9] : memref<16x128xf32, #tpu.memory_space<vmem>>, vector<16x128xf32>
    tpu.vector_store %arg3[%c0_8, %c0_9], %17 {strides = array<i32>} : memref<16x128xf32, #tpu.memory_space<vmem>>, vector<16x128xf32>,
    %cst_10 = arith.constant -0.79850769 : f32
    %19 = vector.broadcast %cst_10 : f32 to vector<16x128xf32>
    %20 = arith.subf %19, %11 : vector<16x128xf32>
    %21 = arith.subf %20, %16 : vector<16x128xf32>
    %c0_11 = arith.constant 0 : index
    %c0_12 = arith.constant 0 : index
    %22 = vector.load %arg4[%c0_11, %c0_12] : memref<16x128xf32, #tpu.memory_space<vmem>>, vector<16x128xf32>
    tpu.vector_store %arg4[%c0_11, %c0_12], %21 {strides = array<i32>} : memref<16x128xf32, #tpu.memory_space<vmem>>, vector<16x128xf32>,
    return
  }
  func.func @transform_0(%arg0: i32) -> (i32, i32) {
    %c0_i32 = arith.constant 0 : i32
    %c0_i32_0 = arith.constant 0 : i32
    return %arg0, %c0_i32 : i32, i32
  }
  func.func @transform_1(%arg0: i32) -> (i32, i32) {
    %c0_i32 = arith.constant 0 : i32
    %c0_i32_0 = arith.constant 0 : i32
    return %arg0, %c0_i32 : i32, i32
  }
  func.func @transform_2(%arg0: i32) -> (i32, i32) {
    %c0_i32 = arith.constant 0 : i32
    %c0_i32_0 = arith.constant 0 : i32
    return %arg0, %c0_i32 : i32, i32
  }
  func.func @transform_3(%arg0: i32) -> (i32, i32) {
    %c0_i32 = arith.constant 0 : i32
    %c0_i32_0 = arith.constant 0 : i32
    return %arg0, %c0_i32 : i32, i32
  }
}

</mosaic_0001>

<llo_original>
// kernel: tpu_custom_call.1
$region0: #{tpu_custom_call.1}
  #allocation0 [shape = 'u32[]', space=smem, size = 0x4, offset = 0x4, fixed_abs, tag = 'smem constant byte address 0x4 - core index']
  #allocation1 [shape = 'u32[144,128]{1,0:T(1,128)}', space=vmem, size = 0x12000, scoped, tag = 'internal scratch']
  %s0 = inlined_call_operand.hbm [shape: f32[16,128], index: 0, kind: input, shape index: {}]
  %s1 = inlined_call_operand.hbm [shape: f32[16,128], index: 1, kind: input, shape index: {}]
  %s2 = inlined_call_operand.hbm [shape: f32[16,128], index: 2, kind: output, shape index: {0}]
  %s3 = inlined_call_operand.hbm [shape: f32[16,128], index: 3, kind: output, shape index: {1}]
  %4 = xla_tuple %s2, %s3
  %s5 = sld [smem:[#allocation0]]
  $region34: #{tpu_custom_call.1} parent=0
    _
  %s7 = ssub.s32 1, %s5
  %s8 = scalar_select 0, %s7, %s5
  $region1: #{tpu_custom_call.1} parent=0
    #allocation2 [shape = 'u8[8192]{0}', space=vmem, size = 0x2000, scoped, tag = 'input window, operand 0, single buffered']
    #allocation3 [shape = 's32[1]{0}', space=sflag, size = 0x4, scoped, tag = 'scoped memory for tpu_custom_call.1']
    #allocation4 [shape = 's32[1]{0}', space=sflag, size = 0x4, scoped, tag = 'scoped memory for tpu_custom_call.1']
    #allocation5 [shape = 'u8[8192]{0}', space=vmem, size = 0x2000, scoped, tag = 'input window, operand 1, single buffered']
    #allocation6 [shape = 's32[1]{0}', space=sflag, size = 0x4, scoped, tag = 'scoped memory for tpu_custom_call.1']
    #allocation7 [shape = 'u8[8192]{0}', space=vmem, size = 0x2000, scoped, tag = 'output window, operand 0, single buffered']
    #allocation8 [shape = 'u8[8192]{0}', space=vmem, size = 0x2000, scoped, tag = 'output window, operand 1, single buffered']
    #allocation9 [shape = 's32[1]{0}', space=sflag, size = 0x4, scoped, tag = 'scoped memory for tpu_custom_call.1']
    %9 = vsyncpa [#allocation3], 0
    %10 = vsyncpa [#allocation6], 0
    %11 = vsyncpa [#allocation4], 0
    %12 = vsyncpa [#allocation9], 0
    // Predicated region
    $region2: #{tpu_custom_call.1} parent=1 // pred_check
      _
    $region3: #{tpu_custom_call.1} parent=1 // pred_check_branch
      %14 = sbr.rel (0) target = $region5
    $region4: #{tpu_custom_call.1} parent=1 // pred_region
      %s16 = ssub.s32 256, 256
      %17 = vsyncadd [#allocation3], %s16
      %s18 = sshll.u32 [#allocation2], 4
      %s19 = int_to_ptr.vmem [resolvable:$true] %s18
      %24 = dma.hbm_to_vmem [thread:$0]  %s0, 256, %s19, [#allocation3], 128, 128, 8
    $region5: #{tpu_custom_call.1} parent=1 // pred_fallthru
      _
    // Predicated region
    $region6: #{tpu_custom_call.1} parent=1 // pred_check
      _
    $region7: #{tpu_custom_call.1} parent=1 // pred_check_branch
      %26 = sbr.rel (0) target = $region9
    $region8: #{tpu_custom_call.1} parent=1 // pred_region
      %s28 = ssub.s32 256, 256
      %29 = vsyncadd [#allocation6], %s28
      %s30 = sshll.u32 [#allocation5], 4
      %s31 = int_to_ptr.vmem [resolvable:$true] %s30
      %36 = dma.hbm_to_vmem [thread:$0]  %s1, 256, %s31, [#allocation6], 128, 128, 8
    $region9: #{tpu_custom_call.1} parent=1 // pred_fallthru
      _
    // Predicated region
    $region10: #{tpu_custom_call.1} parent=1 // pred_check
      _
    $region11: #{tpu_custom_call.1} parent=1 // pred_check_branch
      %38 = sbr.rel (0) target = $region13
    $region12: #{tpu_custom_call.1} parent=1 // pred_region
      %39 = dma.done [#allocation3], 256
    $region13: #{tpu_custom_call.1} parent=1 // pred_fallthru
      _
    // Predicated region
    $region14: #{tpu_custom_call.1} parent=1 // pred_check
      _
    $region15: #{tpu_custom_call.1} parent=1 // pred_check_branch
      %41 = sbr.rel (0) target = $region17
    $region16: #{tpu_custom_call.1} parent=1 // pred_region
      %42 = dma.done [#allocation6], 256
    $region17: #{tpu_custom_call.1} parent=1 // pred_fallthru
      _
    %v43 = vld [vmem:[#allocation2] sm:$0xff]
    %v44 = vld [vmem:[#allocation2 + $0x8] sm:$0xff]
    %v45 = vld [vmem:[#allocation5] sm:$0xff]
    %v46 = vld [vmem:[#allocation5 + $0x8] sm:$0xff]
    %v47 = vadd.f32 %v43, %v45
    %v48 = vadd.f32 %v44, %v46
    %v49 = vmul.f32 %v47, 0.5
    %v50 = vmul.f32 %v48, 0.5
    %v51 = vmul.f32 %v49, 0.9
    %v52 = vmul.f32 %v50, 0.9
    %v53 = vadd.f32 %v51, 0.05
    %v54 = vadd.f32 %v52, 0.05
    %v55 = vmax.f32 %v53, 1e-22
    %v56 = vmax.f32 %v54, 1e-22
    %v57 = vlog2.pop %v55
    %v58 = vmul.f32 %v57, 0.6931472
    %v59 = vlog2.pop %v56
    %v60 = vmul.f32 %v59, 0.6931472
    %v61 = vsub.f32 1.0, %v53
    %v62 = vsub.f32 1.0, %v54
    %v63 = vmax.f32 %v61, 1e-22
    %v64 = vmax.f32 %v62, 1e-22
    %v65 = vlog2.pop %v63
    %v66 = vmul.f32 %v65, 0.6931472
    %v67 = vlog2.pop %v64
    %v68 = vmul.f32 %v67, 0.6931472
    %v69 = vsub.f32 %v58, %v66
    %v70 = vsub.f32 %v60, %v68
    %71 = vst [vmem:[#allocation7] sm:$0xff] %v69
    %72 = vst [vmem:[#allocation7 + $0x8] sm:$0xff] %v70
    %v73 = vsub.f32 -0.7985077, %v58
    %v74 = vsub.f32 -0.7985077, %v60
    %v75 = vsub.f32 %v73, %v66
    %v76 = vsub.f32 %v74, %v68
    %77 = vst [vmem:[#allocation8] sm:$0xff] %v75
    %78 = vst [vmem:[#allocation8 + $0x8] sm:$0xff] %v76
    // Predicated region
    $region18: #{tpu_custom_call.1} parent=1 // pred_check
      _
    $region19: #{tpu_custom_call.1} parent=1 // pred_check_branch
      %80 = sbr.rel (0) target = $region21
    $region20: #{tpu_custom_call.1} parent=1 // pred_region
      %s82 = ssub.s32 256, 256
      %83 = vsyncadd [#allocation4], %s82
      %s84 = sshll.u32 [#allocation7], 4
      %s85 = int_to_ptr.vmem [resolvable:$true] %s84
      %90 = dma.vmem_to_hbm [thread:$0]  %s85, 256, %s2, [#allocation4], 128, 128, 8
    $region21: #{tpu_custom_call.1} parent=1 // pred_fallthru
      _
    // Predicated region
    $region22: #{tpu_custom_call.1} parent=1 // pred_check
      _
    $region23: #{tpu_custom_call.1} parent=1 // pred_check_branch
      %92 = sbr.rel (0) target = $region25
    $region24: #{tpu_custom_call.1} parent=1 // pred_region
      %s94 = ssub.s32 256, 256
      %95 = vsyncadd [#allocation9], %s94
      %s96 = sshll.u32 [#allocation8], 4
      %s97 = int_to_ptr.vmem [resolvable:$true] %s96
      %102 = dma.vmem_to_hbm [thread:$0]  %s97, 256, %s3, [#allocation9], 128, 128, 8
    $region25: #{tpu_custom_call.1} parent=1 // pred_fallthru
      _
    // Predicated region
    $region26: #{tpu_custom_call.1} parent=1 // pred_check
      _
    $region27: #{tpu_custom_call.1} parent=1 // pred_check_branch
      %104 = sbr.rel (0) target = $region29
    $region28: #{tpu_custom_call.1} parent=1 // pred_region
      %105 = dma.done [#allocation4], 256
    $region29: #{tpu_custom_call.1} parent=1 // pred_fallthru
      _
    // Predicated region
    $region30: #{tpu_custom_call.1} parent=1 // pred_check
      _
    $region31: #{tpu_custom_call.1} parent=1 // pred_check_branch
      %107 = sbr.rel (0) target = $region33
    $region32: #{tpu_custom_call.1} parent=1 // pred_region
      %108 = dma.done [#allocation9], 256
    $region33: #{tpu_custom_call.1} parent=1 // pred_fallthru
      _
    %109 = vsyncpa [#allocation3], 1
    %110 = vsyncpa [#allocation6], 1
    %111 = vsyncpa [#allocation4], 1
    %112 = vsyncpa [#allocation9], 1

</llo_original>
